<compile_context>
chip_gen: v7x
topology: tpu7x:2x2x1
jax: 0.10.0
libtpu: 0.0.40
codegen_flags: <defaults>
</compile_context>

<pallas_src>
import functools

import jax
import jax.numpy as jnp
from jax import lax
from jax.experimental import pallas as pl
from jax.experimental.pallas import tpu as pltpu


def _mha_body(x_ref, wqkv_ref, wo_ref, o_ref, pv_ref, keep, *, heads, dh, scale):
    """Shared attention body. `keep` is a (T, T) bool mask (True = attend)."""
    D = heads * dh
    xb = x_ref[0]                                                    # (T, D) bf16

    # Q / K / V via three K=D matmuls against column slabs of the fused QKV weight
    # (full MXU contraction depth; the f32 intermediates die right after the bf16
    # cast, so no (T, 3D) f32 tensor stays live). The softmax scale is folded into
    # q in f32 before the cast (avoids an extra bf16 rounding step).
    q = (jnp.dot(xb, wqkv_ref[:, 0 * D:1 * D],
                 preferred_element_type=jnp.float32) * scale).astype(jnp.bfloat16)
    k = jnp.dot(xb, wqkv_ref[:, 1 * D:2 * D],
                preferred_element_type=jnp.float32).astype(jnp.bfloat16)
    v = jnp.dot(xb, wqkv_ref[:, 2 * D:3 * D],
                preferred_element_type=jnp.float32).astype(jnp.bfloat16)

    neg = jnp.float32(-1e9)

    # NOTE: at realistic sizes keep dh a multiple of 128 (or process head pairs) so
    # each per-head lane slab below is an aligned, zero-cost view.
    for i in range(heads):
        lo, hi = i * dh, (i + 1) * dh
        q_i = q[:, lo:hi]                                            # (T, dh) bf16
        k_i = k[:, lo:hi]                                            # (T, dh) bf16
        v_i = v[:, lo:hi]                                            # (T, dh) bf16

        # q @ k^T without an explicit transpose: contract the dh axes.
        att = lax.dot_general(q_i, k_i, (((1,), (1,)), ((), ())),
                              preferred_element_type=jnp.float32)    # (T, T) f32
        # masked_fill(~mask, -1e9). Fully-masked rows degrade to uniform attention,
        # exactly like PyTorch masked_fill + softmax.
        att = jnp.where(keep, att, neg)

        # Numerically-stable softmax in f32; the reciprocal goes to the EUP slot.
        # (approx=True: rows don't sum to exactly 1 -- fine at inference tolerances.)
        att = att - jnp.max(att, axis=-1, keepdims=True)
        att = jnp.exp(att)
        att = att * pl.reciprocal(jnp.sum(att, axis=-1, keepdims=True), approx=True)
        # TODO(synk): nn.Dropout(p) on the attention probs omitted (eval mode -> identity).

        # Drop this head's (att @ v) into its dh-wide lane slab of the (T, D) buffer;
        # the output projection happens once below with full K=D MXU depth.
        pv_ref[:, lo:hi] = jnp.dot(att.astype(jnp.bfloat16), v_i,
                                   preferred_element_type=jnp.float32
                                   ).astype(jnp.bfloat16)

    # Single (T, D) @ (D, D) output projection, stored straight into the output block
    # (no f32 accumulator scratch, no per-head read-modify-write of a (T, D) buffer).
    o_ref[0] = jnp.dot(pv_ref[...], wo_ref[...],
                       preferred_element_type=jnp.float32).astype(o_ref.dtype)


def _mha_kernel_causal(x_ref, wqkv_ref, wo_ref, o_ref, pv_ref, *, heads, dh, scale, T):
    # Causal keep-mask built in-kernel: no T^2 mask DMA and no resident mask VMEM.
    row = lax.broadcasted_iota(jnp.int32, (T, T), 0)
    col = lax.broadcasted_iota(jnp.int32, (T, T), 1)
    keep = row >= col
    _mha_body(x_ref, wqkv_ref, wo_ref, o_ref, pv_ref, keep,
              heads=heads, dh=dh, scale=scale)


def _mha_kernel_masked(x_ref, mask_ref, wqkv_ref, wo_ref, o_ref, pv_ref,
                       *, heads, dh, scale):
    keep = mask_ref[0, 0] > 0                                        # (T, T) bool
    _mha_body(x_ref, wqkv_ref, wo_ref, o_ref, pv_ref, keep,
              heads=heads, dh=dh, scale=scale)


def _vmem_limit_bytes(T, D, has_mask):
    """Explicit scoped-VMEM budget (defaults are 16/32 MiB); clamp to 64 MiB for v7x."""
    bf16, f32 = 2, 4
    est = 0
    est += 2 * T * D * bf16                      # x block (double-buffered)
    est += 2 * T * D * f32                       # output block (double-buffered, f32)
    est += (3 * D * D + D * D) * bf16            # resident weights (single-buffered)
    est += T * D * bf16                          # per-head PV scratch
    est += 3 * T * D * bf16 + 2 * T * T * f32    # live q/k/v + score intermediates
    if has_mask:
        est += T * T                             # int8 mask
    est *= 2                                     # headroom for compiler-internal scratch
    return int(min(max(est, 32 << 20), 64 << 20))


def multi_head_attention(x, mask, w_qkv, w_o, heads, *, causal=False,
                         out_dtype=jnp.float32):
    """Forward of MultiHeadAttention (eval mode, no dropout).

    x: (B, T, D) float; mask: (1 or B, 1, T, T) bool, True = attend (ignored when
    causal=True); w_qkv: (3D, D) and w_o: (D, D) in nn.Linear [out, in] layout.
    out_dtype: float32 matches the PyTorch module; pass bfloat16 to halve output
    writeback bytes if the consumer accepts it.
    """
    B, T, D = x.shape
    assert D % heads == 0
    dh = D // heads
    scale = dh ** -0.5

    # nn.Linear computes x @ W.T -> pre-transpose once here (glue, not hot path).
    # bf16 activations / weights for the MXU; accumulation stays f32 in-kernel.
    x_b = x.astype(jnp.bfloat16)
    wqkv_t = jnp.asarray(w_qkv).T.astype(jnp.bfloat16)               # (D, 3D)
    wo_t = jnp.asarray(w_o).T.astype(jnp.bfloat16)                   # (D, D)

    # Weights are fetched once and stay resident: single-buffer them so default
    # double-buffering doesn't double their VMEM footprint (v7x: 64 MiB physical).
    resident = pl.Buffered(1)
    x_spec = pl.BlockSpec((1, T, D), lambda b: (b, 0, 0))
    wqkv_spec = pl.BlockSpec((D, 3 * D), lambda b: (0, 0), pipeline_mode=resident)
    wo_spec = pl.BlockSpec((D, D), lambda b: (0, 0), pipeline_mode=resident)
    out_spec = pl.BlockSpec((1, T, D), lambda b: (b, 0, 0))

    if causal:
        kernel = functools.partial(_mha_kernel_causal,
                                   heads=heads, dh=dh, scale=scale, T=T)
        in_specs = [x_spec, wqkv_spec, wo_spec]
        operands = (x_b, wqkv_t, wo_t)
        has_mask = False
    else:
        mask_i8 = mask.astype(jnp.int8)                              # 1 B/elem, not 4
        mb = mask_i8.shape[0]
        if mb == 1:
            # Batch-invariant mask: constant index_map + single buffer -> DMA'd once.
            mask_spec = pl.BlockSpec((1, 1, T, T), lambda b: (0, 0, 0, 0),
                                     pipeline_mode=resident)
        else:
            mask_spec = pl.BlockSpec((1, 1, T, T), lambda b: (b, 0, 0, 0))
        kernel = functools.partial(_mha_kernel_masked,
                                   heads=heads, dh=dh, scale=scale)
        in_specs = [x_spec, mask_spec, wqkv_spec, wo_spec]
        operands = (x_b, mask_i8, wqkv_t, wo_t)
        has_mask = True

    return pl.pallas_call(
        kernel,
        out_shape=jax.ShapeDtypeStruct((B, T, D), out_dtype),
        grid_spec=pltpu.PrefetchScalarGridSpec(
            num_scalar_prefetch=0,
            # B >= 2 keeps both v7x TensorCores busy; if B could be 1, add a parallel
            # query-tile grid axis as well.
            grid=(B,),
            in_specs=in_specs,
            out_specs=out_spec,
            scratch_shapes=[pltpu.VMEM((T, D), jnp.bfloat16)],       # per-head PV slabs
        ),
        compiler_params=pltpu.CompilerParams(
            dimension_semantics=("parallel",),
            vmem_limit_bytes=_vmem_limit_bytes(T, D, has_mask)),
    )(*operands)


def reference_mha(x, mask, w_qkv, w_o, heads, compute_dtype=jnp.float32):
    """Pure-JAX reference of the PyTorch forward (dropout in eval mode).

    compute_dtype=float32  -> exact module semantics (scale fold is algebraically a no-op).
    compute_dtype=bfloat16 -> mirrors the kernel's MXU cast points (scale folded into
    f32 q before the bf16 cast, exactly like the kernel).
    """
    B, T, D = x.shape
    dh = D // heads
    scale = dh ** -0.5
    cd = compute_dtype
    qkv = jnp.dot(x.astype(cd), w_qkv.T.astype(cd),
                  preferred_element_type=jnp.float32)                # (B,T,3D) f32
    qkv = qkv.reshape(B, T, 3, heads, dh).transpose(2, 0, 3, 1, 4)   # (3,B,h,T,dh) f32
    q = (qkv[0] * scale).astype(cd)
    k = qkv[1].astype(cd)
    v = qkv[2].astype(cd)
    att = jnp.einsum('bhqd,bhkd->bhqk', q, k,
                     preferred_element_type=jnp.float32)             # (B,h,T,T) f32
    att = jnp.where(mask, att, -1e9)
    att = jax.nn.softmax(att, axis=-1)
    out = jnp.einsum('bhqk,bhkd->bhqd', att.astype(cd), v,
                     preferred_element_type=jnp.float32)             # (B,h,T,dh) f32
    out = out.transpose(0, 2, 1, 3).reshape(B, T, D)
    return jnp.dot(out.astype(cd), w_o.T.astype(cd),
                   preferred_element_type=jnp.float32)


if __name__ == "__main__":
    B, T, D, H = 2, 8, 32, 4

    key = jax.random.PRNGKey(0)
    kx, kq, ko = jax.random.split(key, 3)

    x = jax.random.normal(kx, (B, T, D), dtype=jnp.float32)
    # nn.Linear weight shapes: [out_features, in_features].
    w_qkv = jax.random.normal(kq, (3 * D, D), dtype=jnp.float32) * (1.0 / jnp.sqrt(D))
    w_o = jax.random.normal(ko, (D, D), dtype=jnp.float32) * (1.0 / jnp.sqrt(D))
    # Causal mask, batch-invariant, broadcast over heads: (1, 1, T, T), True = attend.
    mask = jnp.tril(jnp.ones((T, T), dtype=bool))[None, None]

    # Path 1: causal mask generated in-kernel (no mask DMA at all).
    out_causal = multi_head_attention(x, None, w_qkv, w_o, H, causal=True)
    # Path 2: general boolean mask shipped as int8 (same mask -> same result).
    out_masked = multi_head_attention(x, mask, w_qkv, w_o, H)
    out_causal, out_masked = jax.block_until_ready((out_causal, out_masked))
    assert out_causal.shape == (B, T, D) and out_masked.shape == (B, T, D)

    # Check vs. the f32 module semantics (loose tolerance: kernel uses bf16 MXU inputs).
    ref_f32 = reference_mha(x, mask, w_qkv, w_o, H)
    # Check vs. a reference using the kernel's bf16 cast points (tight tolerance).
    ref_bf16 = reference_mha(x, mask, w_qkv, w_o, H, compute_dtype=jnp.bfloat16)
    for out in (out_causal, out_masked):
        assert jnp.allclose(out, ref_f32, atol=5e-2, rtol=5e-2), "mismatch vs f32 reference"
        assert jnp.allclose(out, ref_bf16, atol=1e-2, rtol=1e-2), "mismatch vs bf16 reference"
    assert jnp.allclose(out_causal, out_masked, atol=1e-5, rtol=1e-5), \
        "causal path vs explicit-mask path mismatch"

    print("KERNEL_OK")
</pallas_src>

<mosaic_0001>
module attributes {stable_mosaic.version = 11 : i64} {
  func.func @_mha_kernel_causal(%arg0: i32, %arg1: memref<1x8x32xbf16, #tpu.memory_space<vmem>>, %arg2: memref<32x96xbf16, #tpu.memory_space<vmem>>, %arg3: memref<32x32xbf16, #tpu.memory_space<vmem>>, %arg4: memref<1x8x32xf32, #tpu.memory_space<vmem>>, %arg5: memref<8x32xbf16, #tpu.memory_space<vmem>>) attributes {dimension_semantics = [#tpu.dimension_semantics<parallel>], iteration_bounds = array<i64: 2>, scalar_prefetch = 0 : i64, scratch_operands = 1 : i64, tpu.core_type = #tpu.core_type<tc>, window_params = [{transform_indices = @transform_0, window_bounds = array<i64: 1, 8, 32>}, {pipeline_mode = #tpu.pipeline_mode<synchronous>, transform_indices = @transform_1, window_bounds = array<i64: 32, 96>}, {pipeline_mode = #tpu.pipeline_mode<synchronous>, transform_indices = @transform_2, window_bounds = array<i64: 32, 32>}, {transform_indices = @transform_3, window_bounds = array<i64: 1, 8, 32>}]} {
    %0 = tpu.iota {dimensions = array<i32: 0>} : vector<8x8xi32>
    %1 = tpu.iota {dimensions = array<i32: 1>} : vector<8x8xi32>
    %2 = arith.cmpi sge, %0, %1 : vector<8x8xi32>
    %c0 = arith.constant 0 : index
    %c0_0 = arith.constant 0 : index
    %c0_1 = arith.constant 0 : index
    %3 = vector.load %arg1[%c0, %c0_0, %c0_1] : memref<1x8x32xbf16, #tpu.memory_space<vmem>>, vector<1x8x32xbf16>
    %4 = vector.shape_cast %3 : vector<1x8x32xbf16> to vector<8x32xbf16>
    %c0_2 = arith.constant 0 : index
    %c0_3 = arith.constant 0 : index
    %5 = vector.load %arg2[%c0_2, %c0_3] : memref<32x96xbf16, #tpu.memory_space<vmem>>, vector<32x32xbf16>
    %cst = arith.constant dense<0.000000e+00> : vector<8x32xf32>
    %6 = tpu.matmul %4, %5, %cst {dimension_numbers = #tpu.dot_dimension_numbers<[1], [0], [0], [1], [0, 0, 1, 1], [], []>} : vector<8x32xbf16>, vector<32x32xbf16>, vector<8x32xf32> -> vector<8x32xf32>
    %cst_4 = arith.constant 0.353553385 : f32
    %7 = vector.broadcast %cst_4 : f32 to vector<8x32xf32>
    %8 = arith.mulf %6, %7 : vector<8x32xf32>
    %9 = arith.truncf %8 : vector<8x32xf32> to vector<8x32xbf16>
    %c0_5 = arith.constant 0 : index
    %c32 = arith.constant 32 : index
    %10 = vector.load %arg2[%c0_5, %c32] : memref<32x96xbf16, #tpu.memory_space<vmem>>, vector<32x32xbf16>
    %cst_6 = arith.constant dense<0.000000e+00> : vector<8x32xf32>
    %11 = tpu.matmul %4, %10, %cst_6 {dimension_numbers = #tpu.dot_dimension_numbers<[1], [0], [0], [1], [0, 0, 1, 1], [], []>} : vector<8x32xbf16>, vector<32x32xbf16>, vector<8x32xf32> -> vector<8x32xf32>
    %12 = arith.truncf %11 : vector<8x32xf32> to vector<8x32xbf16>
    %c0_7 = arith.constant 0 : index
    %c64 = arith.constant 64 : index
    %13 = vector.load %arg2[%c0_7, %c64] : memref<32x96xbf16, #tpu.memory_space<vmem>>, vector<32x32xbf16>
    %cst_8 = arith.constant dense<0.000000e+00> : vector<8x32xf32>
    %14 = tpu.matmul %4, %13, %cst_8 {dimension_numbers = #tpu.dot_dimension_numbers<[1], [0], [0], [1], [0, 0, 1, 1], [], []>} : vector<8x32xbf16>, vector<32x32xbf16>, vector<8x32xf32> -> vector<8x32xf32>
    %15 = arith.truncf %14 : vector<8x32xf32> to vector<8x32xbf16>
    %16 = vector.extract_strided_slice %9 {offsets = [0, 0], sizes = [8, 8], strides = [1, 1]} : vector<8x32xbf16> to vector<8x8xbf16>
    %17 = vector.extract_strided_slice %12 {offsets = [0, 0], sizes = [8, 8], strides = [1, 1]} : vector<8x32xbf16> to vector<8x8xbf16>
    %18 = vector.extract_strided_slice %15 {offsets = [0, 0], sizes = [8, 8], strides = [1, 1]} : vector<8x32xbf16> to vector<8x8xbf16>
    %cst_9 = arith.constant dense<0.000000e+00> : vector<8x8xf32>
    %19 = tpu.matmul %16, %17, %cst_9 {dimension_numbers = #tpu.dot_dimension_numbers<[1], [1], [0], [0], [0, 0, 1, 0], [], []>} : vector<8x8xbf16>, vector<8x8xbf16>, vector<8x8xf32> -> vector<8x8xf32>
    %cst_10 = arith.constant -1.000000e+09 : f32
    %20 = vector.broadcast %cst_10 : f32 to vector<8x8xf32>
    %21 = arith.select %2, %19, %20 : vector<8x8xi1>, vector<8x8xf32>
    %cst_11 = arith.constant dense<0xFF800000> : vector<8xf32>
    %22 = vector.multi_reduction <maximumf>, %21, %cst_11 [1] : vector<8x8xf32> to vector<8xf32>
    %23 = vector.shape_cast %22 : vector<8xf32> to vector<8x1xf32>
    %24 = vector.broadcast %23 : vector<8x1xf32> to vector<8x8xf32>
    %25 = arith.subf %21, %24 : vector<8x8xf32>
    %26 = math.exp %25 : vector<8x8xf32>
    %cst_12 = arith.constant dense<0.000000e+00> : vector<8xf32>
    %27 = vector.multi_reduction <add>, %26, %cst_12 [1] : vector<8x8xf32> to vector<8xf32>
    %28 = vector.shape_cast %27 : vector<8xf32> to vector<8x1xf32>
    %29 = tpu.reciprocal %28 {approx = true} : vector<8x1xf32> -> vector<8x1xf32>
    %30 = vector.broadcast %29 : vector<8x1xf32> to vector<8x8xf32>
    %31 = arith.mulf %26, %30 : vector<8x8xf32>
    %32 = arith.truncf %31 : vector<8x8xf32> to vector<8x8xbf16>
    %cst_13 = arith.constant dense<0.000000e+00> : vector<8x8xf32>
    %33 = tpu.matmul %32, %18, %cst_13 {dimension_numbers = #tpu.dot_dimension_numbers<[1], [0], [0], [1], [0, 0, 1, 1], [], []>} : vector<8x8xbf16>, vector<8x8xbf16>, vector<8x8xf32> -> vector<8x8xf32>
    %34 = arith.truncf %33 : vector<8x8xf32> to vector<8x8xbf16>
    %c0_14 = arith.constant 0 : index
    %c0_15 = arith.constant 0 : index
    %35 = vector.load %arg5[%c0_14, %c0_15] : memref<8x32xbf16, #tpu.memory_space<vmem>>, vector<8x8xbf16>
    tpu.vector_store %arg5[%c0_14, %c0_15], %34 {strides = array<i32>} : memref<8x32xbf16, #tpu.memory_space<vmem>>, vector<8x8xbf16>,
    %36 = vector.extract_strided_slice %9 {offsets = [0, 8], sizes = [8, 8], strides = [1, 1]} : vector<8x32xbf16> to vector<8x8xbf16>
    %37 = vector.extract_strided_slice %12 {offsets = [0, 8], sizes = [8, 8], strides = [1, 1]} : vector<8x32xbf16> to vector<8x8xbf16>
    %38 = vector.extract_strided_slice %15 {offsets = [0, 8], sizes = [8, 8], strides = [1, 1]} : vector<8x32xbf16> to vector<8x8xbf16>
    %cst_16 = arith.constant dense<0.000000e+00> : vector<8x8xf32>
    %39 = tpu.matmul %36, %37, %cst_16 {dimension_numbers = #tpu.dot_dimension_numbers<[1], [1], [0], [0], [0, 0, 1, 0], [], []>} : vector<8x8xbf16>, vector<8x8xbf16>, vector<8x8xf32> -> vector<8x8xf32>
    %cst_17 = arith.constant -1.000000e+09 : f32
    %40 = vector.broadcast %cst_17 : f32 to vector<8x8xf32>
    %41 = arith.select %2, %39, %40 : vector<8x8xi1>, vector<8x8xf32>
    %cst_18 = arith.constant dense<0xFF800000> : vector<8xf32>
    %42 = vector.multi_reduction <maximumf>, %41, %cst_18 [1] : vector<8x8xf32> to vector<8xf32>
    %43 = vector.shape_cast %42 : vector<8xf32> to vector<8x1xf32>
    %44 = vector.broadcast %43 : vector<8x1xf32> to vector<8x8xf32>
    %45 = arith.subf %41, %44 : vector<8x8xf32>
    %46 = math.exp %45 : vector<8x8xf32>
    %cst_19 = arith.constant dense<0.000000e+00> : vector<8xf32>
    %47 = vector.multi_reduction <add>, %46, %cst_19 [1] : vector<8x8xf32> to vector<8xf32>
    %48 = vector.shape_cast %47 : vector<8xf32> to vector<8x1xf32>
    %49 = tpu.reciprocal %48 {approx = true} : vector<8x1xf32> -> vector<8x1xf32>
    %50 = vector.broadcast %49 : vector<8x1xf32> to vector<8x8xf32>
    %51 = arith.mulf %46, %50 : vector<8x8xf32>
    %52 = arith.truncf %51 : vector<8x8xf32> to vector<8x8xbf16>
    %cst_20 = arith.constant dense<0.000000e+00> : vector<8x8xf32>
    %53 = tpu.matmul %52, %38, %cst_20 {dimension_numbers = #tpu.dot_dimension_numbers<[1], [0], [0], [1], [0, 0, 1, 1], [], []>} : vector<8x8xbf16>, vector<8x8xbf16>, vector<8x8xf32> -> vector<8x8xf32>
    %54 = arith.truncf %53 : vector<8x8xf32> to vector<8x8xbf16>
    %c0_21 = arith.constant 0 : index
    %c8 = arith.constant 8 : index
    %55 = vector.load %arg5[%c0_21, %c8] : memref<8x32xbf16, #tpu.memory_space<vmem>>, vector<8x8xbf16>
    tpu.vector_store %arg5[%c0_21, %c8], %54 {strides = array<i32>} : memref<8x32xbf16, #tpu.memory_space<vmem>>, vector<8x8xbf16>,
    %56 = vector.extract_strided_slice %9 {offsets = [0, 16], sizes = [8, 8], strides = [1, 1]} : vector<8x32xbf16> to vector<8x8xbf16>
    %57 = vector.extract_strided_slice %12 {offsets = [0, 16], sizes = [8, 8], strides = [1, 1]} : vector<8x32xbf16> to vector<8x8xbf16>
    %58 = vector.extract_strided_slice %15 {offsets = [0, 16], sizes = [8, 8], strides = [1, 1]} : vector<8x32xbf16> to vector<8x8xbf16>
    %cst_22 = arith.constant dense<0.000000e+00> : vector<8x8xf32>
    %59 = tpu.matmul %56, %57, %cst_22 {dimension_numbers = #tpu.dot_dimension_numbers<[1], [1], [0], [0], [0, 0, 1, 0], [], []>} : vector<8x8xbf16>, vector<8x8xbf16>, vector<8x8xf32> -> vector<8x8xf32>
    %cst_23 = arith.constant -1.000000e+09 : f32
    %60 = vector.broadcast %cst_23 : f32 to vector<8x8xf32>
    %61 = arith.select %2, %59, %60 : vector<8x8xi1>, vector<8x8xf32>
    %cst_24 = arith.constant dense<0xFF800000> : vector<8xf32>
    %62 = vector.multi_reduction <maximumf>, %61, %cst_24 [1] : vector<8x8xf32> to vector<8xf32>
    %63 = vector.shape_cast %62 : vector<8xf32> to vector<8x1xf32>
    %64 = vector.broadcast %63 : vector<8x1xf32> to vector<8x8xf32>
    %65 = arith.subf %61, %64 : vector<8x8xf32>
    %66 = math.exp %65 : vector<8x8xf32>
    %cst_25 = arith.constant dense<0.000000e+00> : vector<8xf32>
    %67 = vector.multi_reduction <add>, %66, %cst_25 [1] : vector<8x8xf32> to vector<8xf32>
    %68 = vector.shape_cast %67 : vector<8xf32> to vector<8x1xf32>
    %69 = tpu.reciprocal %68 {approx = true} : vector<8x1xf32> -> vector<8x1xf32>
    %70 = vector.broadcast %69 : vector<8x1xf32> to vector<8x8xf32>
    %71 = arith.mulf %66, %70 : vector<8x8xf32>
    %72 = arith.truncf %71 : vector<8x8xf32> to vector<8x8xbf16>
    %cst_26 = arith.constant dense<0.000000e+00> : vector<8x8xf32>
    %73 = tpu.matmul %72, %58, %cst_26 {dimension_numbers = #tpu.dot_dimension_numbers<[1], [0], [0], [1], [0, 0, 1, 1], [], []>} : vector<8x8xbf16>, vector<8x8xbf16>, vector<8x8xf32> -> vector<8x8xf32>
    %74 = arith.truncf %73 : vector<8x8xf32> to vector<8x8xbf16>
    %c0_27 = arith.constant 0 : index
    %c16 = arith.constant 16 : index
    %75 = vector.load %arg5[%c0_27, %c16] : memref<8x32xbf16, #tpu.memory_space<vmem>>, vector<8x8xbf16>
    tpu.vector_store %arg5[%c0_27, %c16], %74 {strides = array<i32>} : memref<8x32xbf16, #tpu.memory_space<vmem>>, vector<8x8xbf16>,
    %76 = vector.extract_strided_slice %9 {offsets = [0, 24], sizes = [8, 8], strides = [1, 1]} : vector<8x32xbf16> to vector<8x8xbf16>
    %77 = vector.extract_strided_slice %12 {offsets = [0, 24], sizes = [8, 8], strides = [1, 1]} : vector<8x32xbf16> to vector<8x8xbf16>
    %78 = vector.extract_strided_slice %15 {offsets = [0, 24], sizes = [8, 8], strides = [1, 1]} : vector<8x32xbf16> to vector<8x8xbf16>
    %cst_28 = arith.constant dense<0.000000e+00> : vector<8x8xf32>
    %79 = tpu.matmul %76, %77, %cst_28 {dimension_numbers = #tpu.dot_dimension_numbers<[1], [1], [0], [0], [0, 0, 1, 0], [], []>} : vector<8x8xbf16>, vector<8x8xbf16>, vector<8x8xf32> -> vector<8x8xf32>
    %cst_29 = arith.constant -1.000000e+09 : f32
    %80 = vector.broadcast %cst_29 : f32 to vector<8x8xf32>
    %81 = arith.select %2, %79, %80 : vector<8x8xi1>, vector<8x8xf32>
    %cst_30 = arith.constant dense<0xFF800000> : vector<8xf32>
    %82 = vector.multi_reduction <maximumf>, %81, %cst_30 [1] : vector<8x8xf32> to vector<8xf32>
    %83 = vector.shape_cast %82 : vector<8xf32> to vector<8x1xf32>
    %84 = vector.broadcast %83 : vector<8x1xf32> to vector<8x8xf32>
    %85 = arith.subf %81, %84 : vector<8x8xf32>
    %86 = math.exp %85 : vector<8x8xf32>
    %cst_31 = arith.constant dense<0.000000e+00> : vector<8xf32>
    %87 = vector.multi_reduction <add>, %86, %cst_31 [1] : vector<8x8xf32> to vector<8xf32>
    %88 = vector.shape_cast %87 : vector<8xf32> to vector<8x1xf32>
    %89 = tpu.reciprocal %88 {approx = true} : vector<8x1xf32> -> vector<8x1xf32>
    %90 = vector.broadcast %89 : vector<8x1xf32> to vector<8x8xf32>
    %91 = arith.mulf %86, %90 : vector<8x8xf32>
    %92 = arith.truncf %91 : vector<8x8xf32> to vector<8x8xbf16>
    %cst_32 = arith.constant dense<0.000000e+00> : vector<8x8xf32>
    %93 = tpu.matmul %92, %78, %cst_32 {dimension_numbers = #tpu.dot_dimension_numbers<[1], [0], [0], [1], [0, 0, 1, 1], [], []>} : vector<8x8xbf16>, vector<8x8xbf16>, vector<8x8xf32> -> vector<8x8xf32>
    %94 = arith.truncf %93 : vector<8x8xf32> to vector<8x8xbf16>
    %c0_33 = arith.constant 0 : index
    %c24 = arith.constant 24 : index
    %95 = vector.load %arg5[%c0_33, %c24] : memref<8x32xbf16, #tpu.memory_space<vmem>>, vector<8x8xbf16>
    tpu.vector_store %arg5[%c0_33, %c24], %94 {strides = array<i32>} : memref<8x32xbf16, #tpu.memory_space<vmem>>, vector<8x8xbf16>,
    %c0_34 = arith.constant 0 : index
    %c0_35 = arith.constant 0 : index
    %96 = vector.load %arg5[%c0_34, %c0_35] : memref<8x32xbf16, #tpu.memory_space<vmem>>, vector<8x32xbf16>
    %c0_36 = arith.constant 0 : index
    %c0_37 = arith.constant 0 : index
    %97 = vector.load %arg3[%c0_36, %c0_37] : memref<32x32xbf16, #tpu.memory_space<vmem>>, vector<32x32xbf16>
    %cst_38 = arith.constant dense<0.000000e+00> : vector<8x32xf32>
    %98 = tpu.matmul %96, %97, %cst_38 {dimension_numbers = #tpu.dot_dimension_numbers<[1], [0], [0], [1], [0, 0, 1, 1], [], []>} : vector<8x32xbf16>, vector<32x32xbf16>, vector<8x32xf32> -> vector<8x32xf32>
    %c0_39 = arith.constant 0 : index
    %c0_40 = arith.constant 0 : index
    %c0_41 = arith.constant 0 : index
    %99 = vector.load %arg4[%c0_39, %c0_40, %c0_41] : memref<1x8x32xf32, #tpu.memory_space<vmem>>, vector<1x8x32xf32>
    %100 = vector.shape_cast %99 : vector<1x8x32xf32> to vector<8x32xf32>
    %101 = vector.shape_cast %98 : vector<8x32xf32> to vector<1x8x32xf32>
    tpu.vector_store %arg4[%c0_39, %c0_40, %c0_41], %101 {strides = array<i32>} : memref<1x8x32xf32, #tpu.memory_space<vmem>>, vector<1x8x32xf32>,
    return
  }
  func.func @transform_0(%arg0: i32) -> (i32, i32, i32) {
    %c0_i32 = arith.constant 0 : i32
    %c0_i32_0 = arith.constant 0 : i32
    %c0_i32_1 = arith.constant 0 : i32
    return %arg0, %c0_i32, %c0_i32_0 : i32, i32, i32
  }
  func.func @transform_1(%arg0: i32) -> (i32, i32) {
    %c0_i32 = arith.constant 0 : i32
    %c0_i32_0 = arith.constant 0 : i32
    %c0_i32_1 = arith.constant 0 : i32
    return %c0_i32, %c0_i32_0 : i32, i32
  }
  func.func @transform_2(%arg0: i32) -> (i32, i32) {
    %c0_i32 = arith.constant 0 : i32
    %c0_i32_0 = arith.constant 0 : i32
    %c0_i32_1 = arith.constant 0 : i32
    return %c0_i32, %c0_i32_0 : i32, i32
  }
  func.func @transform_3(%arg0: i32) -> (i32, i32, i32) {
    %c0_i32 = arith.constant 0 : i32
    %c0_i32_0 = arith.constant 0 : i32
    %c0_i32_1 = arith.constant 0 : i32
    return %arg0, %c0_i32, %c0_i32_0 : i32, i32, i32
  }
}

</mosaic_0001>

<llo_original>
// kernel: tpu_custom_call.1
$region0: #{tpu_custom_call.1}
  #allocation0 [shape = 'u32[]', space=smem, size = 0x4, offset = 0x4, fixed_abs, tag = 'smem constant byte address 0x4 - core index']
  #allocation1 [shape = 'u32[144,128]{1,0:T(1,128)}', space=vmem, size = 0x12000, scoped, tag = 'internal scratch']
  #allocation2 [shape = 'bf16[8,32]{1,0:T(8,128)(2,1)}', space=vmem, size = 0x800, scoped, tag = 'scratch operand']
  %s0 = inlined_call_operand.hbm [shape: bf16[2,8,32], index: 0, kind: input, shape index: {}]
  %s1 = inlined_call_operand.hbm [shape: bf16[32,96], index: 1, kind: input, shape index: {}]
  %s2 = inlined_call_operand.hbm [shape: bf16[32,32], index: 2, kind: input, shape index: {}]
  %s3 = inlined_call_operand.hbm [shape: f32[2,8,32], index: 3, kind: output, shape index: {}]
  %s4 = sld [smem:[#allocation0]]
  $region57: #{tpu_custom_call.1} parent=0
    _
  %s6 = ssub.s32 1, %s4
  %s7 = scalar_select 0, %s6, %s4
  $region1: #{tpu_custom_call.1} parent=0
    #allocation3 [shape = 'u8[4096]{0}', space=vmem, size = 0x1000, scoped, tag = 'input window, operand 0']
    #allocation4 [shape = 's32[2]{0}', space=sflag, size = 0x8, scoped, tag = 'scoped memory for tpu_custom_call.1']
    #allocation5 [shape = 's32[2]{0}', space=sflag, size = 0x8, scoped, tag = 'scoped memory for tpu_custom_call.1']
    #allocation6 [shape = 'u8[8192]{0}', space=vmem, size = 0x2000, scoped, tag = 'input window, operand 1, single buffered']
    #allocation7 [shape = 's32[1]{0}', space=sflag, size = 0x4, scoped, tag = 'scoped memory for tpu_custom_call.1']
    #allocation8 [shape = 'u8[8192]{0}', space=vmem, size = 0x2000, scoped, tag = 'input window, operand 2, single buffered']
    #allocation9 [shape = 'u8[8192]{0}', space=vmem, size = 0x2000, scoped, tag = 'output window, operand 0']
    %8 = vsyncpa [#allocation4], 0
    %s9 = scalar_lea.sflag [#allocation4], 1
    %10 = vsyncpa %s9, 0
    %11 = vsyncpa [#allocation7], 0
    %12 = vsyncpa [#allocation5], 0
    %s13 = scalar_lea.sflag [#allocation5], 1
    %14 = vsyncpa %s13, 0
    loop: start=0, step=1, limit=4
    $region2: #{tpu_custom_call.1} parent=1 // loop_pre_header
      _
    $region3: #{tpu_custom_call.1} parent=1 // loop_header
      %s16 = sphi 0, %s20
      %p17 = scmp.ge.s32.totalorder %s16, 4
      %s26 = sphi 0, %s28
      %s29 = sphi 0, %s26
      %s30 = sphi 0, %s29
      %s46 = sphi 0, %s30
      %s50 = sphi 0, %s50
      %s52 = sphi 0, %s50
      %s53 = sphi 0, %s52
      %s67 = sphi 0, %s53
      %s71 = sphi 0, %s71
      %s73 = sphi 0, %s71
      %s74 = sphi 0, %s73
      %s88 = sphi 0, %s74
      %s94 = sphi 0, %s96
      %s97 = sphi 0, %s94
      %s98 = sphi 0, %s97
      %s114 = sphi 0, %s98
    $region4: #{tpu_custom_call.1} parent=1 // loop_header_branch
      %19 = sbr.rel (%p17) target = $region8
    $region5: #{tpu_custom_call.1} parent=1 // loop_body
      %s21 = ssub.s32 %s16, 1
      %s22 = ssub.s32 %s16, 2
      %s23 = sadd.s32 %s16, 1
      %s24 = ssub.s32 %s16, %s23
      %p25 = scmp.eq.s32.totalorder %s24, 0
      %s27 = sadd.s32 %s26, 1
      %s28 = scalar_select %p25, %s26, %s27
      %p31 = pneg %p25
      %p32 = scmp.eq.s32.totalorder %s16, 1
      %p33 = por %p31, %p32
      %p34 = scmp.ne.s32.totalorder %s26, %s29
      %p35 = scmp.eq.s32.totalorder %s16, 0
      %p36 = por %p34, %p35
      %p37 = scmp.ne.s32.totalorder %s26, %s29
      %p38 = scmp.eq.s32.totalorder %s21, 1
      %p39 = por %p37, %p38
      %p40 = scmp.ne.s32.totalorder %s29, %s30
      %p41 = scmp.eq.s32.totalorder %s21, 0
      %p42 = por %p40, %p41
      %p43 = scmp.ne.s32.totalorder %s29, %s30
      %p44 = scmp.eq.s32.totalorder %s22, 1
      %p45 = por %p43, %p44
      %p47 = scmp.ne.s32.totalorder %s30, %s46
      %p48 = scmp.eq.s32.totalorder %s22, 0
      %p49 = por %p47, %p48
      %s51 = sadd.s32 %s50, 1
      %p54 = scmp.eq.s32.totalorder %s16, 1
      %p55 = scmp.ne.s32.totalorder %s50, %s52
      %p56 = scmp.eq.s32.totalorder %s16, 0
      %p57 = por %p55, %p56
      %p58 = scmp.ne.s32.totalorder %s50, %s52
      %p59 = scmp.eq.s32.totalorder %s21, 1
      %p60 = por %p58, %p59
      %p61 = scmp.ne.s32.totalorder %s52, %s53
      %p62 = scmp.eq.s32.totalorder %s21, 0
      %p63 = por %p61, %p62
      %p64 = scmp.ne.s32.totalorder %s52, %s53
      %p65 = scmp.eq.s32.totalorder %s22, 1
      %p66 = por %p64, %p65
      %p68 = scmp.ne.s32.totalorder %s53, %s67
      %p69 = scmp.eq.s32.totalorder %s22, 0
      %p70 = por %p68, %p69
      %s72 = sadd.s32 %s71, 1
      %p75 = scmp.eq.s32.totalorder %s16, 1
      %p76 = scmp.ne.s32.totalorder %s71, %s73
      %p77 = scmp.eq.s32.totalorder %s16, 0
      %p78 = por %p76, %p77
      %p79 = scmp.ne.s32.totalorder %s71, %s73
      %p80 = scmp.eq.s32.totalorder %s21, 1
      %p81 = por %p79, %p80
      %p82 = scmp.ne.s32.totalorder %s73, %s74
      %p83 = scmp.eq.s32.totalorder %s21, 0
      %p84 = por %p82, %p83
      %p85 = scmp.ne.s32.totalorder %s73, %s74
      %p86 = scmp.eq.s32.totalorder %s22, 1
      %p87 = por %p85, %p86
      %p89 = scmp.ne.s32.totalorder %s74, %s88
      %p90 = scmp.eq.s32.totalorder %s22, 0
      %p91 = por %p89, %p90
      %s92 = ssub.s32 %s16, %s23
      %p93 = scmp.eq.s32.totalorder %s92, 0
      %s95 = sadd.s32 %s94, 1
      %s96 = scalar_select %p93, %s94, %s95
      %p99 = pneg %p93
      %p100 = scmp.eq.s32.totalorder %s16, 1
      %p101 = por %p99, %p100
      %p102 = scmp.ne.s32.totalorder %s94, %s97
      %p103 = scmp.eq.s32.totalorder %s16, 0
      %p104 = por %p102, %p103
      %p105 = scmp.ne.s32.totalorder %s94, %s97
      %p106 = scmp.eq.s32.totalorder %s21, 1
      %p107 = por %p105, %p106
      %p108 = scmp.ne.s32.totalorder %s97, %s98
      %p109 = scmp.eq.s32.totalorder %s21, 0
      %p110 = por %p108, %p109
      %p111 = scmp.ne.s32.totalorder %s97, %s98
      %p112 = scmp.eq.s32.totalorder %s22, 1
      %p113 = por %p111, %p112
      %p115 = scmp.ne.s32.totalorder %s98, %s114
      %p116 = scmp.eq.s32.totalorder %s22, 0
      %p117 = por %p115, %p116
      %p118 = scmp.le.s32.totalorder 1, %s16
      %p119 = scmp.lt.s32.totalorder %s16, 3
      %p120 = pnand %p118, %p119
      %p121 = pneg %p120
      // Predicated region
      $region9: #{tpu_custom_call.1} parent=5 // pred_check
        _
      $region10: #{tpu_custom_call.1} parent=5 // pred_check_branch
        %123 = sbr.rel (%p120) target = $region12
      $region11: #{tpu_custom_call.1} parent=5 // pred_region
        %s124 = ssub.s32 %s16, 1
        // Predicated region
        $region13: #{tpu_custom_call.1} parent=11 // pred_check
          %p125 = pneg %p63
        $region14: #{tpu_custom_call.1} parent=11 // pred_check_branch
          %127 = sbr.rel (%p125) target = $region16
        $region15: #{tpu_custom_call.1} parent=11 // pred_region
          %s129 = ssub.s32 256, 256
          %130 = vsyncadd [#allocation7], %s129
          %s131 = sshll.u32 [#allocation6], 4
          %s132 = int_to_ptr.vmem [resolvable:$true] %s131
          %137 = dma.hbm_to_vmem [thread:$0]  %s1, 256, %s132, [#allocation7], 64, 64, 4
        $region16: #{tpu_custom_call.1} parent=11 // pred_fallthru
          _
        // Predicated region
        $region17: #{tpu_custom_call.1} parent=11 // pred_check
          %p138 = pneg %p84
        $region18: #{tpu_custom_call.1} parent=11 // pred_check_branch
          %140 = sbr.rel (%p138) target = $region20
        $region19: #{tpu_custom_call.1} parent=11 // pred_region
          %s142 = ssub.s32 256, 256
          %143 = vsyncadd [#allocation7], %s142
          %s144 = sshll.u32 [#allocation8], 4
          %s145 = int_to_ptr.vmem [resolvable:$true] %s144
          %150 = dma.hbm_to_vmem [thread:$0]  %s2, 256, %s145, [#allocation7], 64, 64, 4
        $region20: #{tpu_custom_call.1} parent=11 // pred_fallthru
          _
      $region12: #{tpu_custom_call.1} parent=5 // pred_fallthru
        _
      %p151 = scmp.lt.s32.totalorder %s16, 2
      // Predicated region
      $region21: #{tpu_custom_call.1} parent=5 // pred_check
        %p152 = pneg %p151
      $region22: #{tpu_custom_call.1} parent=5 // pred_check_branch
        %154 = sbr.rel (%p152) target = $region24
      $region23: #{tpu_custom_call.1} parent=5 // pred_region
        // Predicated region
        $region25: #{tpu_custom_call.1} parent=23 // pred_check
          %p155 = pneg %p36
        $region26: #{tpu_custom_call.1} parent=23 // pred_check_branch
          %157 = sbr.rel (%p155) target = $region28
        $region27: #{tpu_custom_call.1} parent=23 // pred_region
          %s158 = sand.u32 %s26, 1
          %s159 = scalar_lea.sflag [#allocation4], %s158
          %s160 = sand.u32 %s26, 1
          %s161 = smul.addr %s160, 4
          %s162 = scalar_lea.vmem [#allocation3], %s161
          %s164 = ssub.s32 64, 64
          %165 = vsyncadd %s159, %s164
          %s166 = smul.addr %s16, 64
          %s167 = scalar_lea.hbm %s0, %s166
          %s169 = sshll.u32 %s162, 4
          %s170 = int_to_ptr.vmem [resolvable:$true] %s169
          %172 = dma.hbm_to_vmem [thread:$0]  %s167, 64, %s170, %s159
        $region28: #{tpu_custom_call.1} parent=23 // pred_fallthru
          _
      $region24: #{tpu_custom_call.1} parent=5 // pred_fallthru
        _
      %p173 = scmp.le.s32.totalorder 1, %s16
      %p174 = scmp.lt.s32.totalorder %s16, 3
      %p175 = pnand %p173, %p174
      %p176 = pneg %p175
      // Predicated region
      $region29: #{tpu_custom_call.1} parent=5 // pred_check
        _
      $region30: #{tpu_custom_call.1} parent=5 // pred_check_branch
        %178 = sbr.rel (%p175) target = $region32
      $region31: #{tpu_custom_call.1} parent=5 // pred_region
        %s179 = ssub.s32 %s16, 1
        %s180 = sand.u32 %s29, 1
        %s181 = scalar_lea.sflag [#allocation4], %s180
        %s182 = sand.u32 %s29, 1
        %s183 = smul.addr %s182, 4
        %s184 = scalar_lea.vmem [#allocation3], %s183
        // Predicated region
        $region33: #{tpu_custom_call.1} parent=31 // pred_check
          %p185 = pneg %p42
        $region34: #{tpu_custom_call.1} parent=31 // pred_check_branch
          %187 = sbr.rel (%p185) target = $region36
        $region35: #{tpu_custom_call.1} parent=31 // pred_region
          %188 = dma.done %s181, 64
        $region36: #{tpu_custom_call.1} parent=31 // pred_fallthru
          _
        // Predicated region
        $region37: #{tpu_custom_call.1} parent=31 // pred_check
          %p189 = pneg %p63
        $region38: #{tpu_custom_call.1} parent=31 // pred_check_branch
          %191 = sbr.rel (%p189) target = $region40
        $region39: #{tpu_custom_call.1} parent=31 // pred_region
          %192 = dma.done [#allocation7], 256
        $region40: #{tpu_custom_call.1} parent=31 // pred_fallthru
          _
        // Predicated region
        $region41: #{tpu_custom_call.1} parent=31 // pred_check
          %p193 = pneg %p84
        $region42: #{tpu_custom_call.1} parent=31 // pred_check_branch
          %195 = sbr.rel (%p193) target = $region44
        $region43: #{tpu_custom_call.1} parent=31 // pred_region
          %196 = dma.done [#allocation7], 256
        $region44: #{tpu_custom_call.1} parent=31 // pred_fallthru
          _
        %s197 = sand.u32 %s29, 1
        %s198 = scalar_lea.sflag [#allocation4], %s197
        %s199 = sand.u32 %s29, 1
        %s200 = smul.addr %s199, 4
        %s201 = scalar_lea.vmem [#allocation3], %s200
        %p202 = pneg %p42
        %p203 = pneg %p39
        %p204 = pneg %p63
        %p205 = pneg %p60
        %p206 = pneg %p84
        %p207 = pneg %p81
        %p208 = pneg %p110
        %p209 = pneg %p107
        %s210 = sand.u32 %s97, 1
        %s211 = scalar_lea.sflag [#allocation5], %s210
        %s212 = sand.u32 %s97, 1
        %s213 = smul.addr %s212, 8
        %s214 = scalar_lea.vmem [#allocation9], %s213
        %v216 = vlaneseq
        %v217 = vshrl.u32 %v216, 7
        %v218 = vlaneseq
        %v219 = vand.u32 %v218, 127
        %vm220 = vcmp.ge.s32.totalorder %v217, %v219
        %v221 = vld [vmem:[%s184] sm:$0xf]
        %v222 = vld [vmem:[#allocation6] sm:$0xf]
        %v223 = vld [vmem:[#allocation6 + $0x4] sm:$0xf]
        %v224 = vld [vmem:[#allocation6 + $0x8] sm:$0xf]
        %v225 = vld [vmem:[#allocation6 + $0xc] sm:$0xf]
        %v230 = vunpack.c.l.b16 %v222
        %v231 = vunpack.c.l.b16 %v223
        %v232 = vunpack.c.l.b16 %v224
        %v233 = vunpack.c.l.b16 %v225
        %v234 = vpack.c.b16 %v231, %v230
        %v235 = vpack.c.b16 %v233, %v232
        %vm238 = vcmask 261120
        %v240 = vsel %vm238, %v221, 0
        %242 = vmatprep.subr.bf16.mxu0 0
        %243 = vmatpush1.bf16.msra.mxu0 %v234
        %244 = vmatprep.subr.bf16.mxu0 0
        %245 = vmatpush1.bf16.msra.mxu0 %v235
        %246 = vmatprep.subr.bf16.mxu0 0
        %247 = vmatpush1.bf16.msra.mxu0 0
        %248 = vmatprep.subr.bf16.mxu0 0
        %249 = vmatpush1.bf16.msra.mxu0 0
        %250 = vmatprep.subr.bf16.mxu0 0
        %251 = vmatpush1.bf16.msra.mxu0 0
        %252 = vmatprep.subr.bf16.mxu0 0
        %253 = vmatpush1.bf16.msra.mxu0 0
        %254 = vmatprep.subr.bf16.mxu0 0
        %255 = vmatpush1.bf16.msra.mxu0 0
        %256 = vmatprep.subr.bf16.mxu0 0
        %257 = vmatpush1.bf16.msra.mxu0 0
        %258 = vmatprep.subr.bf16.mxu0 0
        %259 = vmatpush1.bf16.msra.mxu0 0
        %260 = vmatprep.subr.bf16.mxu0 0
        %261 = vmatpush1.bf16.msra.mxu0 0
        %262 = vmatprep.subr.bf16.mxu0 0
        %263 = vmatpush1.bf16.msra.mxu0 0
        %264 = vmatprep.subr.bf16.mxu0 0
        %265 = vmatpush1.bf16.msra.mxu0 0
        %266 = vmatprep.subr.bf16.mxu0 0
        %267 = vmatpush1.bf16.msra.mxu0 0
        %268 = vmatprep.subr.bf16.mxu0 0
        %269 = vmatpush1.bf16.msra.mxu0 0
        %270 = vmatprep.subr.bf16.mxu0 0
        %271 = vmatpush1.bf16.msra.mxu0 0
        %272 = vmatprep.subr.bf16.mxu0 0
        %273 = vmatpush1.bf16.msra.mxu0 0
        %274 = vmatprep.mubr.bf16.mxu0 0
        %275 = vmatmul.mubr.bf16.gmra.mrb[0].mxu0 %v240
        %v276 = vpop.f32.mrb[0].mxu0
        %v277 = vadd.f32 0.0, %v276
        %v278 = vpop.f32.mrb[0].mxu0
        %v279 = vpop.f32.mrb[0].mxu0
        %v280 = vpop.f32.mrb[0].mxu0
        %281 = vdwg.mxu0
        %v282 = vmul.f32 %v277, 0.35355338
        %v283 = vpack.c.bf16 %v282, %v282
        %284 = vrot.lane.b32.xlu0 %v234, 96
        %v285 = vpop.permute.xlu0 %284
        %286 = vrot.lane.b32.xlu0 %v235, 96
        %v287 = vpop.permute.xlu0 %286
        %290 = vmatprep.subr.bf16.mxu0 0
        %291 = vmatpush1.bf16.msra.mxu0 %v285
        %292 = vmatprep.subr.bf16.mxu0 0
        %293 = vmatpush1.bf16.msra.mxu0 %v287
        %294 = vmatprep.subr.bf16.mxu0 0
        %295 = vmatpush1.bf16.msra.mxu0 0
        %296 = vmatprep.subr.bf16.mxu0 0
        %297 = vmatpush1.bf16.msra.mxu0 0
        %298 = vmatprep.subr.bf16.mxu0 0
        %299 = vmatpush1.bf16.msra.mxu0 0
        %300 = vmatprep.subr.bf16.mxu0 0
        %301 = vmatpush1.bf16.msra.mxu0 0
        %302 = vmatprep.subr.bf16.mxu0 0
        %303 = vmatpush1.bf16.msra.mxu0 0
        %304 = vmatprep.subr.bf16.mxu0 0
        %305 = vmatpush1.bf16.msra.mxu0 0
        %306 = vmatprep.subr.bf16.mxu0 0
        %307 = vmatpush1.bf16.msra.mxu0 0
        %308 = vmatprep.subr.bf16.mxu0 0
        %309 = vmatpush1.bf16.msra.mxu0 0
        %310 = vmatprep.subr.bf16.mxu0 0
        %311 = vmatpush1.bf16.msra.mxu0 0
        %312 = vmatprep.subr.bf16.mxu0 0
        %313 = vmatpush1.bf16.msra.mxu0 0
        %314 = vmatprep.subr.bf16.mxu0 0
        %315 = vmatpush1.bf16.msra.mxu0 0
        %316 = vmatprep.subr.bf16.mxu0 0
        %317 = vmatpush1.bf16.msra.mxu0 0
        %318 = vmatprep.subr.bf16.mxu0 0
        %319 = vmatpush1.bf16.msra.mxu0 0
        %320 = vmatprep.subr.bf16.mxu0 0
        %321 = vmatpush1.bf16.msra.mxu0 0
        %322 = vmatprep.mubr.bf16.mxu0 0
        %323 = vmatmul.mubr.bf16.gmra.mrb[0].mxu0 %v240
        %v324 = vpop.f32.mrb[0].mxu0
        %v325 = vadd.f32 0.0, %v324
        %v326 = vpop.f32.mrb[0].mxu0
        %v327 = vpop.f32.mrb[0].mxu0
        %v328 = vpop.f32.mrb[0].mxu0
        %329 = vdwg.mxu0
        %v330 = vpack.c.bf16 %v325, %v325
        %331 = vrot.lane.b32.xlu0 %v234, 64
        %v332 = vpop.permute.xlu0 %331
        %333 = vrot.lane.b32.xlu0 %v235, 64
        %v334 = vpop.permute.xlu0 %333
        %337 = vmatprep.subr.bf16.mxu0 0
        %338 = vmatpush1.bf16.msra.mxu0 %v332
        %339 = vmatprep.subr.bf16.mxu0 0
        %340 = vmatpush1.bf16.msra.mxu0 %v334
        %341 = vmatprep.subr.bf16.mxu0 0
        %342 = vmatpush1.bf16.msra.mxu0 0
        %343 = vmatprep.subr.bf16.mxu0 0
        %344 = vmatpush1.bf16.msra.mxu0 0
        %345 = vmatprep.subr.bf16.mxu0 0
        %346 = vmatpush1.bf16.msra.mxu0 0
        %347 = vmatprep.subr.bf16.mxu0 0
        %348 = vmatpush1.bf16.msra.mxu0 0
        %349 = vmatprep.subr.bf16.mxu0 0
        %350 = vmatpush1.bf16.msra.mxu0 0
        %351 = vmatprep.subr.bf16.mxu0 0
        %352 = vmatpush1.bf16.msra.mxu0 0
        %353 = vmatprep.subr.bf16.mxu0 0
        %354 = vmatpush1.bf16.msra.mxu0 0
        %355 = vmatprep.subr.bf16.mxu0 0
        %356 = vmatpush1.bf16.msra.mxu0 0
        %357 = vmatprep.subr.bf16.mxu0 0
        %358 = vmatpush1.bf16.msra.mxu0 0
        %359 = vmatprep.subr.bf16.mxu0 0
        %360 = vmatpush1.bf16.msra.mxu0 0
        %361 = vmatprep.subr.bf16.mxu0 0
        %362 = vmatpush1.bf16.msra.mxu0 0
        %363 = vmatprep.subr.bf16.mxu0 0
        %364 = vmatpush1.bf16.msra.mxu0 0
        %365 = vmatprep.subr.bf16.mxu0 0
        %366 = vmatpush1.bf16.msra.mxu0 0
        %367 = vmatprep.subr.bf16.mxu0 0
        %368 = vmatpush1.bf16.msra.mxu0 0
        %369 = vmatprep.mubr.bf16.mxu0 0
        %370 = vmatmul.mubr.bf16.gmra.mrb[0].mxu0 %v240
        %v371 = vpop.f32.mrb[0].mxu0
        %v372 = vadd.f32 0.0, %v371
        %v373 = vpop.f32.mrb[0].mxu0
        %v374 = vpop.f32.mrb[0].mxu0
        %v375 = vpop.f32.mrb[0].mxu0
        %376 = vdwg.mxu0
        %v377 = vpack.c.bf16 %v372, %v372
        %vm378 = vcmask 64512
        %v380 = vsel %vm378, %v283, 0
        %v383 = vsel %vm378, %v330, 0
        %385 = vmatprep.subr.bf16.mxu0 0
        %386 = vmatpush1.bf16.xpose.msra.mxu0 %v383
        %387 = vmatprep.subr.bf16.mxu0 0
        %388 = vmatpush1.bf16.xpose.msra.mxu0 0
        %389 = vmatprep.subr.bf16.mxu0 0
        %390 = vmatpush1.bf16.xpose.msra.mxu0 0
        %391 = vmatprep.subr.bf16.mxu0 0
        %392 = vmatpush1.bf16.xpose.msra.mxu0 0
        %393 = vmatprep.subr.bf16.mxu0 0
        %394 = vmatpush1.bf16.xpose.msra.mxu0 0
        %395 = vmatprep.subr.bf16.mxu0 0
        %396 = vmatpush1.bf16.xpose.msra.mxu0 0
        %397 = vmatprep.subr.bf16.mxu0 0
        %398 = vmatpush1.bf16.xpose.msra.mxu0 0
        %399 = vmatprep.subr.bf16.mxu0 0
        %400 = vmatpush1.bf16.xpose.msra.mxu0 0
        %401 = vmatprep.subr.bf16.mxu0 0
        %402 = vmatpush1.bf16.xpose.msra.mxu0 0
        %403 = vmatprep.subr.bf16.mxu0 0
        %404 = vmatpush1.bf16.xpose.msra.mxu0 0
        %405 = vmatprep.subr.bf16.mxu0 0
        %406 = vmatpush1.bf16.xpose.msra.mxu0 0
        %407 = vmatprep.subr.bf16.mxu0 0
        %408 = vmatpush1.bf16.xpose.msra.mxu0 0
        %409 = vmatprep.subr.bf16.mxu0 0
        %410 = vmatpush1.bf16.xpose.msra.mxu0 0
        %411 = vmatprep.subr.bf16.mxu0 0
        %412 = vmatpush1.bf16.xpose.msra.mxu0 0
        %413 = vmatprep.subr.bf16.mxu0 0
        %414 = vmatpush1.bf16.xpose.msra.mxu0 0
        %415 = vmatprep.subr.bf16.mxu0 0
        %416 = vmatpush1.bf16.xpose.msra.mxu0 0
        %417 = vmatprep.mubr.bf16.mxu0 0
        %418 = vmatmul.mubr.bf16.gmra.mrb[0].mxu0 %v380
        %v419 = vpop.f32.mrb[0].mxu0
        %v420 = vadd.f32 0.0, %v419
        %v421 = vpop.f32.mrb[0].mxu0
        %v422 = vpop.f32.mrb[0].mxu0
        %v423 = vpop.f32.mrb[0].mxu0
        %424 = vdwg.mxu0
        %v425 = vsel %vm220, %v420, -1e+09
        %v426 = vsel %vm378, %v425, -inf
        %427 = vmax.xlane.f32.xlu0 %v426
        %v428 = vpop.xlane.xlu0 %427
        %v429 = vsub.f32 %v425, %v428
        %v430 = vmul.f32 %v429, 1.442695
        %v431 = vpow.pop %v430
        %v432 = vsel %vm378, %v431, 0.0
        %433 = vadd.xlane.f32.xlu0 %v432
        %v434 = vpop.xlane.xlu0 %433
        %v435 = vrcp.pop %v434
        %v436 = vmul.f32 %v431, %v435
        %v437 = vpack.c.bf16 %v436, %v436
        %v439 = vsel %vm378, %v437, 0
        %vm441 = vcmask 1043456
        %v443 = vsel %vm441, %v377, 0
        %445 = vmatprep.subr.bf16.mxu0 0
        %446 = vmatpush1.bf16.msra.mxu0 %v443
        %447 = vmatprep.subr.bf16.mxu0 0
        %448 = vmatpush1.bf16.msra.mxu0 0
        %449 = vmatprep.subr.bf16.mxu0 0
        %450 = vmatpush1.bf16.msra.mxu0 0
        %451 = vmatprep.subr.bf16.mxu0 0
        %452 = vmatpush1.bf16.msra.mxu0 0
        %453 = vmatprep.subr.bf16.mxu0 0
        %454 = vmatpush1.bf16.msra.mxu0 0
        %455 = vmatprep.subr.bf16.mxu0 0
        %456 = vmatpush1.bf16.msra.mxu0 0
        %457 = vmatprep.subr.bf16.mxu0 0
        %458 = vmatpush1.bf16.msra.mxu0 0
        %459 = vmatprep.subr.bf16.mxu0 0
        %460 = vmatpush1.bf16.msra.mxu0 0
        %461 = vmatprep.subr.bf16.mxu0 0
        %462 = vmatpush1.bf16.msra.mxu0 0
        %463 = vmatprep.subr.bf16.mxu0 0
        %464 = vmatpush1.bf16.msra.mxu0 0
        %465 = vmatprep.subr.bf16.mxu0 0
        %466 = vmatpush1.bf16.msra.mxu0 0
        %467 = vmatprep.subr.bf16.mxu0 0
        %468 = vmatpush1.bf16.msra.mxu0 0
        %469 = vmatprep.subr.bf16.mxu0 0
        %470 = vmatpush1.bf16.msra.mxu0 0
        %471 = vmatprep.subr.bf16.mxu0 0
        %472 = vmatpush1.bf16.msra.mxu0 0
        %473 = vmatprep.subr.bf16.mxu0 0
        %474 = vmatpush1.bf16.msra.mxu0 0
        %475 = vmatprep.subr.bf16.mxu0 0
        %476 = vmatpush1.bf16.msra.mxu0 0
        %477 = vmatprep.mubr.bf16.mxu0 0
        %478 = vmatmul.mubr.bf16.gmra.mrb[0].mxu0 %v439
        %v479 = vpop.f32.mrb[0].mxu0
        %v480 = vadd.f32 0.0, %v479
        %v481 = vpop.f32.mrb[0].mxu0
        %v482 = vpop.f32.mrb[0].mxu0
        %v483 = vpop.f32.mrb[0].mxu0
        %484 = vdwg.mxu0
        %v485 = vpack.c.bf16 %v480, %v480
        %vm486 = vcmask 60416
        %487 = vst.msk [vmem:[#allocation2] sm:$0xf] %vm486, %v485
        %489 = vrot.lane.b32.xlu0 %v283, 120
        %v490 = vpop.permute.xlu0 %489
        %492 = vrot.lane.b32.xlu0 %v330, 120
        %v493 = vpop.permute.xlu0 %492
        %v495 = vsel %vm378, %v490, 0
        %v498 = vsel %vm378, %v493, 0
        %500 = vmatprep.subr.bf16.mxu0 0
        %501 = vmatpush1.bf16.xpose.msra.mxu0 %v498
        %502 = vmatprep.subr.bf16.mxu0 0
        %503 = vmatpush1.bf16.xpose.msra.mxu0 0
        %504 = vmatprep.subr.bf16.mxu0 0
        %505 = vmatpush1.bf16.xpose.msra.mxu0 0
        %506 = vmatprep.subr.bf16.mxu0 0
        %507 = vmatpush1.bf16.xpose.msra.mxu0 0
        %508 = vmatprep.subr.bf16.mxu0 0
        %509 = vmatpush1.bf16.xpose.msra.mxu0 0
        %510 = vmatprep.subr.bf16.mxu0 0
        %511 = vmatpush1.bf16.xpose.msra.mxu0 0
        %512 = vmatprep.subr.bf16.mxu0 0
        %513 = vmatpush1.bf16.xpose.msra.mxu0 0
        %514 = vmatprep.subr.bf16.mxu0 0
        %515 = vmatpush1.bf16.xpose.msra.mxu0 0
        %516 = vmatprep.subr.bf16.mxu0 0
        %517 = vmatpush1.bf16.xpose.msra.mxu0 0
        %518 = vmatprep.subr.bf16.mxu0 0
        %519 = vmatpush1.bf16.xpose.msra.mxu0 0
        %520 = vmatprep.subr.bf16.mxu0 0
        %521 = vmatpush1.bf16.xpose.msra.mxu0 0
        %522 = vmatprep.subr.bf16.mxu0 0
        %523 = vmatpush1.bf16.xpose.msra.mxu0 0
        %524 = vmatprep.subr.bf16.mxu0 0
        %525 = vmatpush1.bf16.xpose.msra.mxu0 0
        %526 = vmatprep.subr.bf16.mxu0 0
        %527 = vmatpush1.bf16.xpose.msra.mxu0 0
        %528 = vmatprep.subr.bf16.mxu0 0
        %529 = vmatpush1.bf16.xpose.msra.mxu0 0
        %530 = vmatprep.subr.bf16.mxu0 0
        %531 = vmatpush1.bf16.xpose.msra.mxu0 0
        %532 = vmatprep.mubr.bf16.mxu0 0
        %533 = vmatmul.mubr.bf16.gmra.mrb[0].mxu0 %v495
        %v534 = vpop.f32.mrb[0].mxu0
        %v535 = vadd.f32 0.0, %v534
        %v536 = vpop.f32.mrb[0].mxu0
        %v537 = vpop.f32.mrb[0].mxu0
        %v538 = vpop.f32.mrb[0].mxu0
        %539 = vdwg.mxu0
        %v540 = vsel %vm220, %v535, -1e+09
        %v541 = vsel %vm378, %v540, -inf
        %542 = vmax.xlane.f32.xlu0 %v541
        %v543 = vpop.xlane.xlu0 %542
        %v544 = vsub.f32 %v540, %v543
        %v545 = vmul.f32 %v544, 1.442695
        %v546 = vpow.pop %v545
        %v547 = vsel %vm378, %v546, 0.0
        %548 = vadd.xlane.f32.xlu0 %v547
        %v549 = vpop.xlane.xlu0 %548
        %v550 = vrcp.pop %v549
        %v551 = vmul.f32 %v546, %v550
        %v552 = vpack.c.bf16 %v551, %v551
        %554 = vrot.lane.b32.xlu0 %v377, 120
        %v555 = vpop.permute.xlu0 %554
        %v557 = vsel %vm378, %v552, 0
        %v560 = vsel %vm441, %v555, 0
        %562 = vmatprep.subr.bf16.mxu0 0
        %563 = vmatpush1.bf16.msra.mxu0 %v560
        %564 = vmatprep.subr.bf16.mxu0 0
        %565 = vmatpush1.bf16.msra.mxu0 0
        %566 = vmatprep.subr.bf16.mxu0 0
        %567 = vmatpush1.bf16.msra.mxu0 0
        %568 = vmatprep.subr.bf16.mxu0 0
        %569 = vmatpush1.bf16.msra.mxu0 0
        %570 = vmatprep.subr.bf16.mxu0 0
        %571 = vmatpush1.bf16.msra.mxu0 0
        %572 = vmatprep.subr.bf16.mxu0 0
        %573 = vmatpush1.bf16.msra.mxu0 0
        %574 = vmatprep.subr.bf16.mxu0 0
        %575 = vmatpush1.bf16.msra.mxu0 0
        %576 = vmatprep.subr.bf16.mxu0 0
        %577 = vmatpush1.bf16.msra.mxu0 0
        %578 = vmatprep.subr.bf16.mxu0 0
        %579 = vmatpush1.bf16.msra.mxu0 0
        %580 = vmatprep.subr.bf16.mxu0 0
        %581 = vmatpush1.bf16.msra.mxu0 0
        %582 = vmatprep.subr.bf16.mxu0 0
        %583 = vmatpush1.bf16.msra.mxu0 0
        %584 = vmatprep.subr.bf16.mxu0 0
        %585 = vmatpush1.bf16.msra.mxu0 0
        %586 = vmatprep.subr.bf16.mxu0 0
        %587 = vmatpush1.bf16.msra.mxu0 0
        %588 = vmatprep.subr.bf16.mxu0 0
        %589 = vmatpush1.bf16.msra.mxu0 0
        %590 = vmatprep.subr.bf16.mxu0 0
        %591 = vmatpush1.bf16.msra.mxu0 0
        %592 = vmatprep.subr.bf16.mxu0 0
        %593 = vmatpush1.bf16.msra.mxu0 0
        %594 = vmatprep.mubr.bf16.mxu0 0
        %595 = vmatmul.mubr.bf16.gmra.mrb[0].mxu0 %v557
        %v596 = vpop.f32.mrb[0].mxu0
        %v597 = vadd.f32 0.0, %v596
        %v598 = vpop.f32.mrb[0].mxu0
        %v599 = vpop.f32.mrb[0].mxu0
        %v600 = vpop.f32.mrb[0].mxu0
        %601 = vdwg.mxu0
        %v602 = vpack.c.bf16 %v597, %v597
        %v604 = vunpack.c.l.b16 %v602
        %v605 = vpack.c.b16 %v604, %v604
        %606 = vrot.lane.b32.xlu0 %v605, 8
        %v607 = vpop.permute.xlu0 %606
        %vm609 = vcmask 126016
        %610 = vst.msk [vmem:[#allocation2] sm:$0xf] %vm609, %v607
        %611 = vrot.lane.b32.xlu0 %v283, 112
        %v612 = vpop.permute.xlu0 %611
        %613 = vrot.lane.b32.xlu0 %v330, 112
        %v614 = vpop.permute.xlu0 %613
        %v616 = vsel %vm378, %v612, 0
        %v619 = vsel %vm378, %v614, 0
        %621 = vmatprep.subr.bf16.mxu0 0
        %622 = vmatpush1.bf16.xpose.msra.mxu0 %v619
        %623 = vmatprep.subr.bf16.mxu0 0
        %624 = vmatpush1.bf16.xpose.msra.mxu0 0
        %625 = vmatprep.subr.bf16.mxu0 0
        %626 = vmatpush1.bf16.xpose.msra.mxu0 0
        %627 = vmatprep.subr.bf16.mxu0 0
        %628 = vmatpush1.bf16.xpose.msra.mxu0 0
        %629 = vmatprep.subr.bf16.mxu0 0
        %630 = vmatpush1.bf16.xpose.msra.mxu0 0
        %631 = vmatprep.subr.bf16.mxu0 0
        %632 = vmatpush1.bf16.xpose.msra.mxu0 0
        %633 = vmatprep.subr.bf16.mxu0 0
        %634 = vmatpush1.bf16.xpose.msra.mxu0 0
        %635 = vmatprep.subr.bf16.mxu0 0
        %636 = vmatpush1.bf16.xpose.msra.mxu0 0
        %637 = vmatprep.subr.bf16.mxu0 0
        %638 = vmatpush1.bf16.xpose.msra.mxu0 0
        %639 = vmatprep.subr.bf16.mxu0 0
        %640 = vmatpush1.bf16.xpose.msra.mxu0 0
        %641 = vmatprep.subr.bf16.mxu0 0
        %642 = vmatpush1.bf16.xpose.msra.mxu0 0
        %643 = vmatprep.subr.bf16.mxu0 0
        %644 = vmatpush1.bf16.xpose.msra.mxu0 0
        %645 = vmatprep.subr.bf16.mxu0 0
        %646 = vmatpush1.bf16.xpose.msra.mxu0 0
        %647 = vmatprep.subr.bf16.mxu0 0
        %648 = vmatpush1.bf16.xpose.msra.mxu0 0
        %649 = vmatprep.subr.bf16.mxu0 0
        %650 = vmatpush1.bf16.xpose.msra.mxu0 0
        %651 = vmatprep.subr.bf16.mxu0 0
        %652 = vmatpush1.bf16.xpose.msra.mxu0 0
        %653 = vmatprep.mubr.bf16.mxu0 0
        %654 = vmatmul.mubr.bf16.gmra.mrb[0].mxu0 %v616
        %v655 = vpop.f32.mrb[0].mxu0
        %v656 = vadd.f32 0.0, %v655
        %v657 = vpop.f32.mrb[0].mxu0
        %v658 = vpop.f32.mrb[0].mxu0
        %v659 = vpop.f32.mrb[0].mxu0
        %660 = vdwg.mxu0
        %v661 = vsel %vm220, %v656, -1e+09
        %v662 = vsel %vm378, %v661, -inf
        %663 = vmax.xlane.f32.xlu0 %v662
        %v664 = vpop.xlane.xlu0 %663
        %v665 = vsub.f32 %v661, %v664
        %v666 = vmul.f32 %v665, 1.442695
        %v667 = vpow.pop %v666
        %v668 = vsel %vm378, %v667, 0.0
        %669 = vadd.xlane.f32.xlu0 %v668
        %v670 = vpop.xlane.xlu0 %669
        %v671 = vrcp.pop %v670
        %v672 = vmul.f32 %v667, %v671
        %v673 = vpack.c.bf16 %v672, %v672
        %674 = vrot.lane.b32.xlu0 %v377, 112
        %v675 = vpop.permute.xlu0 %674
        %v677 = vsel %vm378, %v673, 0
        %v680 = vsel %vm441, %v675, 0
        %682 = vmatprep.subr.bf16.mxu0 0
        %683 = vmatpush1.bf16.msra.mxu0 %v680
        %684 = vmatprep.subr.bf16.mxu0 0
        %685 = vmatpush1.bf16.msra.mxu0 0
        %686 = vmatprep.subr.bf16.mxu0 0
        %687 = vmatpush1.bf16.msra.mxu0 0
        %688 = vmatprep.subr.bf16.mxu0 0
        %689 = vmatpush1.bf16.msra.mxu0 0
        %690 = vmatprep.subr.bf16.mxu0 0
        %691 = vmatpush1.bf16.msra.mxu0 0
        %692 = vmatprep.subr.bf16.mxu0 0
        %693 = vmatpush1.bf16.msra.mxu0 0
        %694 = vmatprep.subr.bf16.mxu0 0
        %695 = vmatpush1.bf16.msra.mxu0 0
        %696 = vmatprep.subr.bf16.mxu0 0
        %697 = vmatpush1.bf16.msra.mxu0 0
        %698 = vmatprep.subr.bf16.mxu0 0
        %699 = vmatpush1.bf16.msra.mxu0 0
        %700 = vmatprep.subr.bf16.mxu0 0
        %701 = vmatpush1.bf16.msra.mxu0 0
        %702 = vmatprep.subr.bf16.mxu0 0
        %703 = vmatpush1.bf16.msra.mxu0 0
        %704 = vmatprep.subr.bf16.mxu0 0
        %705 = vmatpush1.bf16.msra.mxu0 0
        %706 = vmatprep.subr.bf16.mxu0 0
        %707 = vmatpush1.bf16.msra.mxu0 0
        %708 = vmatprep.subr.bf16.mxu0 0
        %709 = vmatpush1.bf16.msra.mxu0 0
        %710 = vmatprep.subr.bf16.mxu0 0
        %711 = vmatpush1.bf16.msra.mxu0 0
        %712 = vmatprep.subr.bf16.mxu0 0
        %713 = vmatpush1.bf16.msra.mxu0 0
        %714 = vmatprep.mubr.bf16.mxu0 0
        %715 = vmatmul.mubr.bf16.gmra.mrb[0].mxu0 %v677
        %v716 = vpop.f32.mrb[0].mxu0
        %v717 = vadd.f32 0.0, %v716
        %v718 = vpop.f32.mrb[0].mxu0
        %v719 = vpop.f32.mrb[0].mxu0
        %v720 = vpop.f32.mrb[0].mxu0
        %721 = vdwg.mxu0
        %v722 = vpack.c.bf16 %v717, %v717
        %v724 = vunpack.c.l.b16 %v722
        %v725 = vpack.c.b16 %v724, %v724
        %726 = vrot.lane.b32.xlu0 %v725, 16
        %v727 = vpop.permute.xlu0 %726
        %vm729 = vcmask 191616
        %730 = vst.msk [vmem:[#allocation2] sm:$0xf] %vm729, %v727
        %731 = vrot.lane.b32.xlu0 %v283, 104
        %v732 = vpop.permute.xlu0 %731
        %733 = vrot.lane.b32.xlu0 %v330, 104
        %v734 = vpop.permute.xlu0 %733
        %v736 = vsel %vm378, %v732, 0
        %v739 = vsel %vm378, %v734, 0
        %741 = vmatprep.subr.bf16.mxu0 0
        %742 = vmatpush1.bf16.xpose.msra.mxu0 %v739
        %743 = vmatprep.subr.bf16.mxu0 0
        %744 = vmatpush1.bf16.xpose.msra.mxu0 0
        %745 = vmatprep.subr.bf16.mxu0 0
        %746 = vmatpush1.bf16.xpose.msra.mxu0 0
        %747 = vmatprep.subr.bf16.mxu0 0
        %748 = vmatpush1.bf16.xpose.msra.mxu0 0
        %749 = vmatprep.subr.bf16.mxu0 0
        %750 = vmatpush1.bf16.xpose.msra.mxu0 0
        %751 = vmatprep.subr.bf16.mxu0 0
        %752 = vmatpush1.bf16.xpose.msra.mxu0 0
        %753 = vmatprep.subr.bf16.mxu0 0
        %754 = vmatpush1.bf16.xpose.msra.mxu0 0
        %755 = vmatprep.subr.bf16.mxu0 0
        %756 = vmatpush1.bf16.xpose.msra.mxu0 0
        %757 = vmatprep.subr.bf16.mxu0 0
        %758 = vmatpush1.bf16.xpose.msra.mxu0 0
        %759 = vmatprep.subr.bf16.mxu0 0
        %760 = vmatpush1.bf16.xpose.msra.mxu0 0
        %761 = vmatprep.subr.bf16.mxu0 0
        %762 = vmatpush1.bf16.xpose.msra.mxu0 0
        %763 = vmatprep.subr.bf16.mxu0 0
        %764 = vmatpush1.bf16.xpose.msra.mxu0 0
        %765 = vmatprep.subr.bf16.mxu0 0
        %766 = vmatpush1.bf16.xpose.msra.mxu0 0
        %767 = vmatprep.subr.bf16.mxu0 0
        %768 = vmatpush1.bf16.xpose.msra.mxu0 0
        %769 = vmatprep.subr.bf16.mxu0 0
        %770 = vmatpush1.bf16.xpose.msra.mxu0 0
        %771 = vmatprep.subr.bf16.mxu0 0
        %772 = vmatpush1.bf16.xpose.msra.mxu0 0
        %773 = vmatprep.mubr.bf16.mxu0 0
        %774 = vmatmul.mubr.bf16.gmra.mrb[0].mxu0 %v736
        %v775 = vpop.f32.mrb[0].mxu0
        %v776 = vadd.f32 0.0, %v775
        %v777 = vpop.f32.mrb[0].mxu0
        %v778 = vpop.f32.mrb[0].mxu0
        %v779 = vpop.f32.mrb[0].mxu0
        %780 = vdwg.mxu0
        %v781 = vsel %vm220, %v776, -1e+09
        %v782 = vsel %vm378, %v781, -inf
        %783 = vmax.xlane.f32.xlu0 %v782
        %v784 = vpop.xlane.xlu0 %783
        %v785 = vsub.f32 %v781, %v784
        %v786 = vmul.f32 %v785, 1.442695
        %v787 = vpow.pop %v786
        %v788 = vsel %vm378, %v787, 0.0
        %789 = vadd.xlane.f32.xlu0 %v788
        %v790 = vpop.xlane.xlu0 %789
        %v791 = vrcp.pop %v790
        %v792 = vmul.f32 %v787, %v791
        %v793 = vpack.c.bf16 %v792, %v792
        %794 = vrot.lane.b32.xlu0 %v377, 104
        %v795 = vpop.permute.xlu0 %794
        %v797 = vsel %vm378, %v793, 0
        %v800 = vsel %vm441, %v795, 0
        %802 = vmatprep.subr.bf16.mxu0 0
        %803 = vmatpush1.bf16.msra.mxu0 %v800
        %804 = vmatprep.subr.bf16.mxu0 0
        %805 = vmatpush1.bf16.msra.mxu0 0
        %806 = vmatprep.subr.bf16.mxu0 0
        %807 = vmatpush1.bf16.msra.mxu0 0
        %808 = vmatprep.subr.bf16.mxu0 0
        %809 = vmatpush1.bf16.msra.mxu0 0
        %810 = vmatprep.subr.bf16.mxu0 0
        %811 = vmatpush1.bf16.msra.mxu0 0
        %812 = vmatprep.subr.bf16.mxu0 0
        %813 = vmatpush1.bf16.msra.mxu0 0
        %814 = vmatprep.subr.bf16.mxu0 0
        %815 = vmatpush1.bf16.msra.mxu0 0
        %816 = vmatprep.subr.bf16.mxu0 0
        %817 = vmatpush1.bf16.msra.mxu0 0
        %818 = vmatprep.subr.bf16.mxu0 0
        %819 = vmatpush1.bf16.msra.mxu0 0
        %820 = vmatprep.subr.bf16.mxu0 0
        %821 = vmatpush1.bf16.msra.mxu0 0
        %822 = vmatprep.subr.bf16.mxu0 0
        %823 = vmatpush1.bf16.msra.mxu0 0
        %824 = vmatprep.subr.bf16.mxu0 0
        %825 = vmatpush1.bf16.msra.mxu0 0
        %826 = vmatprep.subr.bf16.mxu0 0
        %827 = vmatpush1.bf16.msra.mxu0 0
        %828 = vmatprep.subr.bf16.mxu0 0
        %829 = vmatpush1.bf16.msra.mxu0 0
        %830 = vmatprep.subr.bf16.mxu0 0
        %831 = vmatpush1.bf16.msra.mxu0 0
        %832 = vmatprep.subr.bf16.mxu0 0
        %833 = vmatpush1.bf16.msra.mxu0 0
        %834 = vmatprep.mubr.bf16.mxu0 0
        %835 = vmatmul.mubr.bf16.gmra.mrb[0].mxu0 %v797
        %v836 = vpop.f32.mrb[0].mxu0
        %v837 = vadd.f32 0.0, %v836
        %v838 = vpop.f32.mrb[0].mxu0
        %v839 = vpop.f32.mrb[0].mxu0
        %v840 = vpop.f32.mrb[0].mxu0
        %841 = vdwg.mxu0
        %v842 = vpack.c.bf16 %v837, %v837
        %v844 = vunpack.c.l.b16 %v842
        %v845 = vpack.c.b16 %v844, %v844
        %846 = vrot.lane.b32.xlu0 %v845, 24
        %v847 = vpop.permute.xlu0 %846
        %vm849 = vcmask 257216
        %850 = vst.msk [vmem:[#allocation2] sm:$0xf] %vm849, %v847
        %v851 = vld [vmem:[#allocation2] sm:$0xf]
        %v852 = vld [vmem:[#allocation8] sm:$0xf]
        %v853 = vld [vmem:[#allocation8 + $0x4] sm:$0xf]
        %v854 = vld [vmem:[#allocation8 + $0x8] sm:$0xf]
        %v855 = vld [vmem:[#allocation8 + $0xc] sm:$0xf]
        %v860 = vunpack.c.l.b16 %v852
        %v861 = vunpack.c.l.b16 %v853
        %v862 = vunpack.c.l.b16 %v854
        %v863 = vunpack.c.l.b16 %v855
        %v864 = vpack.c.b16 %v861, %v860
        %v865 = vpack.c.b16 %v863, %v862
        %v869 = vsel %vm238, %v851, 0
        %871 = vmatprep.subr.bf16.mxu0 0
        %872 = vmatpush1.bf16.msra.mxu0 %v864
        %873 = vmatprep.subr.bf16.mxu0 0
        %874 = vmatpush1.bf16.msra.mxu0 %v865
        %875 = vmatprep.subr.bf16.mxu0 0
        %876 = vmatpush1.bf16.msra.mxu0 0
        %877 = vmatprep.subr.bf16.mxu0 0
        %878 = vmatpush1.bf16.msra.mxu0 0
        %879 = vmatprep.subr.bf16.mxu0 0
        %880 = vmatpush1.bf16.msra.mxu0 0
        %881 = vmatprep.subr.bf16.mxu0 0
        %882 = vmatpush1.bf16.msra.mxu0 0
        %883 = vmatprep.subr.bf16.mxu0 0
        %884 = vmatpush1.bf16.msra.mxu0 0
        %885 = vmatprep.subr.bf16.mxu0 0
        %886 = vmatpush1.bf16.msra.mxu0 0
        %887 = vmatprep.subr.bf16.mxu0 0
        %888 = vmatpush1.bf16.msra.mxu0 0
        %889 = vmatprep.subr.bf16.mxu0 0
        %890 = vmatpush1.bf16.msra.mxu0 0
        %891 = vmatprep.subr.bf16.mxu0 0
        %892 = vmatpush1.bf16.msra.mxu0 0
        %893 = vmatprep.subr.bf16.mxu0 0
        %894 = vmatpush1.bf16.msra.mxu0 0
        %895 = vmatprep.subr.bf16.mxu0 0
        %896 = vmatpush1.bf16.msra.mxu0 0
        %897 = vmatprep.subr.bf16.mxu0 0
        %898 = vmatpush1.bf16.msra.mxu0 0
        %899 = vmatprep.subr.bf16.mxu0 0
        %900 = vmatpush1.bf16.msra.mxu0 0
        %901 = vmatprep.subr.bf16.mxu0 0
        %902 = vmatpush1.bf16.msra.mxu0 0
        %903 = vmatprep.mubr.bf16.mxu0 0
        %904 = vmatmul.mubr.bf16.gmra.mrb[0].mxu0 %v869
        %v905 = vpop.f32.mrb[0].mxu0
        %v906 = vadd.f32 0.0, %v905
        %v907 = vpop.f32.mrb[0].mxu0
        %v908 = vpop.f32.mrb[0].mxu0
        %v909 = vpop.f32.mrb[0].mxu0
        %910 = vdwg.mxu0
        %911 = vst.msk [vmem:[%s214] sm:$0xff] %vm238, %v906
        %s912 = sand.u32 %s97, 1
        %s913 = scalar_lea.sflag [#allocation5], %s912
        %s914 = sand.u32 %s97, 1
        %s915 = smul.addr %s914, 8
        %s916 = scalar_lea.vmem [#allocation9], %s915
        // Predicated region
        $region45: #{tpu_custom_call.1} parent=31 // pred_check
          %p917 = pneg %p107
        $region46: #{tpu_custom_call.1} parent=31 // pred_check_branch
          %919 = sbr.rel (%p917) target = $region48
        $region47: #{tpu_custom_call.1} parent=31 // pred_region
          %s921 = ssub.s32 128, 128
          %922 = vsyncadd %s913, %s921
          %s923 = smul.addr %s21, 128
          %s924 = scalar_lea.hbm %s3, %s923
          %s926 = sshll.u32 %s916, 4
          %s927 = int_to_ptr.vmem [resolvable:$true] %s926
          %929 = dma.vmem_to_hbm [thread:$0]  %s927, 128, %s924, %s913
        $region48: #{tpu_custom_call.1} parent=31 // pred_fallthru
          _
      $region32: #{tpu_custom_call.1} parent=5 // pred_fallthru
        _
      %p930 = scmp.le.s32.totalorder 2, %s16
      // Predicated region
      $region49: #{tpu_custom_call.1} parent=5 // pred_check
        %p931 = pneg %p930
      $region50: #{tpu_custom_call.1} parent=5 // pred_check_branch
        %933 = sbr.rel (%p931) target = $region52
      $region51: #{tpu_custom_call.1} parent=5 // pred_region
        %s934 = ssub.s32 %s16, 2
        // Predicated region
        $region53: #{tpu_custom_call.1} parent=51 // pred_check
          %p935 = pneg %p113
        $region54: #{tpu_custom_call.1} parent=51 // pred_check_branch
          %937 = sbr.rel (%p935) target = $region56
        $region55: #{tpu_custom_call.1} parent=51 // pred_region
          %s938 = sand.u32 %s98, 1
          %s939 = scalar_lea.sflag [#allocation5], %s938
          %s940 = sand.u32 %s98, 1
          %s941 = smul.addr %s940, 8
          %s942 = scalar_lea.vmem [#allocation9], %s941
          %943 = dma.done %s939, 128
        $region56: #{tpu_custom_call.1} parent=51 // pred_fallthru
          _
      $region52: #{tpu_custom_call.1} parent=5 // pred_fallthru
        _
    $region6: #{tpu_custom_call.1} parent=1 // loop_footer
      %s20 = sadd.s32 1, %s16
    $region7: #{tpu_custom_call.1} parent=1 // loop_footer_branch
      %15 = sbr.rel target = $region3
    $region8: #{tpu_custom_call.1} parent=1 // loop_exit
      _
    %944 = vsyncpa [#allocation4], 1
    %s945 = scalar_lea.sflag [#allocation4], 1
    %946 = vsyncpa %s945, 1
    %947 = vsyncpa [#allocation7], 1
    %948 = vsyncpa [#allocation5], 1
    %s949 = scalar_lea.sflag [#allocation5], 1
    %950 = vsyncpa %s949, 1

</llo_original>
